<compile_context>
chip_gen: v5e
topology: v5e:2x2
jax: 0.10.0
libtpu: 0.0.40
codegen_flags: <defaults>
</compile_context>

<pallas_src>
import functools

import jax
import jax.numpy as jnp
from jax.experimental import pallas as pl
from jax.experimental.pallas import tpu as pltpu

LANE = 128


# ----------------------------------------------------------------------------
# VMEM budget per TPU generation.
# ----------------------------------------------------------------------------
def _vmem_budget():
    cap = None
    try:
        info = pltpu.get_tpu_info()
        cap = getattr(info, "vmem_capacity_bytes", None)
    except Exception:
        cap = None
    if cap is None:
        cap = 64 * 1024 * 1024                       # assume v7x (most constrained)
    if cap <= 64 * 1024 * 1024:                      # v7x: 64 MiB physical
        return 24 * 1024 * 1024, 32 * 1024 * 1024    # (block budget, vmem_limit_bytes)
    return 48 * 1024 * 1024, 64 * 1024 * 1024        # v5e/v6e: 128 MiB physical


# ----------------------------------------------------------------------------
# Kernel 1: net_frame.forward_multiframe + sigmoid, folded with net_sound /
# net_synthesizer weights into per-(n, b) scalars (alpha, beta).
# Grid = (row tiles, P tiles); the P (pooling) axis is "arbitrary" and accumulates
# the pooling sum into a resident VMEM scratch.
# ----------------------------------------------------------------------------
def frame_encoder_kernel(frames_ref, wf_ref, bf_ref, ws_ref, bs_ref, bsyn_ref,
                         ab_ref, psum_ref, *, p_total, tiled_p):
    j = pl.program_id(1)

    if tiled_p:
        @pl.when(j == 0)
        def _():
            psum_ref[...] = jnp.zeros_like(psum_ref)
        psum_ref[...] += jnp.sum(frames_ref[...], axis=-1)   # partial pooling sum

    def finalize():
        if tiled_p:
            pooled = psum_ref[...] * (1.0 / p_total)          # (nb_t, C) global avg pool
        else:
            pooled = jnp.mean(frames_ref[...], axis=-1)       # single-block fast path
        C = pooled.shape[1]
        feat = bf_ref[...]                                    # (1, K) -> (nb_t, K)
        for c in range(C):                                    # static unroll, C small
            feat = feat + pooled[:, c:c + 1] * wf_ref[c:c + 1, :]
        ff = jax.nn.sigmoid(feat)                             # sigmoid(net_frame(frames))
        # Fold net_sound (1x1 conv 1->K) and net_synthesizer (<.,.> + b) into scalars:
        # logits[n,b] = alpha * log(mag_mix) + beta.
        ab_ref[:, 0:1] = jnp.sum(ff * ws_ref[...], axis=-1, keepdims=True)
        ab_ref[:, 1:2] = (jnp.sum(ff * bs_ref[...], axis=-1, keepdims=True)
                          + bsyn_ref[0, 0])

    if tiled_p:
        pl.when(j == pl.num_programs(1) - 1)(finalize)
    else:
        finalize()


def _frame_tiles(NB, C, P, budget_bytes):
    """Pick (row tile, P tile) for the frames block against the VMEM budget."""
    if NB % 8 == 0:
        nb_t = min(NB, 128)
        while NB % nb_t != 0:
            nb_t -= 8
    else:
        nb_t = NB
    if 2 * nb_t * C * P * 4 <= budget_bytes:          # full-P block (double-buffered)
        return nb_t, P
    if P % LANE != 0:
        # TODO(synk): pad the pooling axis to a multiple of 128 for huge odd frame sizes.
        raise ValueError("frames Tf*H*W too large for VMEM and not a multiple of 128")
    pt = max(LANE, min(P, (budget_bytes // (2 * nb_t * C * 4)) // LANE * LANE))
    while P % pt != 0:
        pt -= LANE
    return nb_t, pt


def frame_alpha_beta(frames, w_frame, b_frame, w_sound, b_sound, b_syn,
                     budget_bytes, vmem_limit):
    """frames: (N, B, C, Tf, H, W) -> (N*B, 2) array of [alpha, beta] per source/batch."""
    N, B, C, Tf, H, W = frames.shape
    NB, P, K = N * B, Tf * H * W, w_frame.shape[1]
    x = frames.reshape(NB, C, P).astype(jnp.float32)

    nb_t, pt = _frame_tiles(NB, C, P, budget_bytes)
    npt = P // pt
    kernel = functools.partial(frame_encoder_kernel,
                               p_total=float(P), tiled_p=(npt > 1))

    return pl.pallas_call(
        kernel,
        grid=(NB // nb_t, npt),
        in_specs=[
            pl.BlockSpec((nb_t, C, pt), lambda i, j: (i, 0, j)),   # frames tile
            pl.BlockSpec((C, K), lambda i, j: (0, 0)),             # w_frame
            pl.BlockSpec((1, K), lambda i, j: (0, 0)),             # b_frame
            pl.BlockSpec((1, K), lambda i, j: (0, 0)),             # w_sound
            pl.BlockSpec((1, K), lambda i, j: (0, 0)),             # b_sound
            pl.BlockSpec((1, 1), lambda i, j: (0, 0)),             # b_syn
        ],
        out_specs=pl.BlockSpec((nb_t, 2), lambda i, j: (i, 0)),    # resident across P axis
        out_shape=jax.ShapeDtypeStruct((NB, 2), jnp.float32),
        scratch_shapes=[pltpu.VMEM((nb_t, C), jnp.float32)],       # pooling-sum accumulator
        compiler_params=pltpu.CompilerParams(
            dimension_semantics=("parallel", "arbitrary"),
            vmem_limit_bytes=vmem_limit),
    )(x, w_frame, b_frame, w_sound, b_sound, b_syn)


# ----------------------------------------------------------------------------
# Kernel 2: the NetWrapper hot path.  Grid = (B * nsplit, row tiles per split);
# the first axis is "parallel" (megacore), the row-tile axis carries the
# per-program loss accumulator (resident output block).
# ----------------------------------------------------------------------------
def netwrapper_kernel(ab_ref, mag_mix_ref, mags_ref,
                      pred_ref, gt_ref, weight_ref, lacc_ref,
                      *, B, nsplit, nt_inner, rt, r_valid, r_pad):
    p = pl.program_id(0)
    j = pl.program_id(1)
    b = (p // nsplit) if nsplit > 1 else p
    N = pred_ref.shape[0]

    mm = mag_mix_ref[0] + 1e-10                        # (rt, 128)  mag_mix + eps (f32)
    w = jnp.clip(jnp.log1p(mm), 0.001, 10.0)           # BCE weight
    log_mag = jnp.log(mm)
    weight_ref[0] = w

    @pl.when(j == 0)
    def _():
        lacc_ref[...] = jnp.zeros_like(lacc_ref)

    wbce = jnp.zeros_like(mm)
    for n in range(N):                                 # static unroll; N (mix_num) small
        alpha = ab_ref[2 * n * B + 2 * b]              # fused per-(n,b) scalars from SMEM
        beta = ab_ref[2 * n * B + 2 * b + 1]
        x = alpha * log_mag + beta                     # fused net_sound + net_synthesizer
        pred = jax.nn.sigmoid(x)                       # f32 on EUP
        pred_ref[n, 0] = pred.astype(pred_ref.dtype)   # bf16 writeback
        gt_b = mags_ref[n, 0].astype(jnp.float32) > 0.5 * mm
        gt_ref[n, 0] = gt_b.astype(gt_ref.dtype)       # int8 writeback (exact {0,1})
        gt_f = gt_b.astype(jnp.float32)
        # weighted BCE, reusing the sigmoid: log1p(exp(-|x|)) == -log(sigmoid(|x|))
        # and sigmoid(|x|) == where(x>=0, pred, 1-pred)  (always >= 0.5 -> no underflow).
        bce = jnp.maximum(x, 0.0) - x * gt_f - jnp.log(jnp.where(x >= 0.0, pred, 1.0 - pred))
        wbce = wbce + w * bce

    if r_pad != r_valid:                               # padded rows -> mask loss only
        if nsplit > 1:
            row_start = ((p % nsplit) * nt_inner + j) * rt
        else:
            row_start = j * rt
        rows = jax.lax.broadcasted_iota(jnp.int32, (rt, 1), 0) + row_start
        wbce = jnp.where(rows < r_valid, wbce, 0.0)

    # vector accumulate only; the scalar reduce happens once in the wrapper
    lacc_ref[0] = lacc_ref[0] + wbce


def _pick_row_tile(R, N, budget_bytes):
    """Pick (rt, r_pad): row tile and (possibly padded) row count against VMEM budget."""
    # per-row bytes: mag_mix f32(4) + mags bf16(2N) + pred bf16(2N) + gt i8(N)
    #                + weight f32(4) + lacc f32(4), all double-buffered.
    bytes_per_row = LANE * (12 + 5 * N) * 2
    max_rt = max(8, budget_bytes // bytes_per_row)
    max_rt = min(max_rt, 1024)                 # past ~512 rows bigger tiles buy nothing
    if R <= max_rt:
        return R, R                            # full-R block (always a legal block shape)
    for align in (32, 16, 8):                  # prefer int8/bf16-friendly row alignment
        if R % align == 0:
            rt = max(align, (max_rt // align) * align)
            while R % rt != 0:
                rt -= align
            return rt, R
    # R too large for one block and not a multiple of 8: pad rows, mask loss in-kernel
    r_pad = ((R + 31) // 32) * 32
    rt = max(32, (max_rt // 32) * 32)
    while r_pad % rt != 0:
        rt -= 32
    return rt, r_pad


def net_wrapper_forward(mag_mix, mags, frames, params):
    """mag_mix: (B,1,F,T), mags: (N,B,1,F,T), frames: (N,B,C,Tf,H,W)."""
    B, _, F, T = mag_mix.shape
    N = mags.shape[0]
    FT = F * T
    if FT % LANE != 0:
        # TODO(synk): pad F*T to a multiple of 128 (with loss masking) for odd shapes.
        raise ValueError("F*T must be a multiple of 128 for the lane-dense layout")
    R = FT // LANE

    block_budget, vmem_limit = _vmem_budget()
    rt, r_pad = _pick_row_tile(R, N, block_budget)

    mag_mix2 = mag_mix[:, 0].astype(jnp.float32)             # (B, F, T)
    mags2 = mags[:, :, 0].astype(jnp.float32)                # (N, B, F, T) (returned as-is)
    mag_mix_r = mag_mix2.reshape(B, R, LANE)                 # lane-dense layout, f32
    mags_r = mags2.astype(jnp.bfloat16).reshape(N, B, R, LANE)   # bf16: threshold-only use
    if r_pad != R:
        mag_mix_r = jnp.pad(mag_mix_r, ((0, 0), (0, r_pad - R), (0, 0)),
                            constant_values=1.0)             # log(1)=0, finite weight
        mags_r = jnp.pad(mags_r, ((0, 0), (0, 0), (0, r_pad - R), (0, 0)))

    # Pallas kernel #1: frame encoder + weight folding -> (N*B, 2) [alpha, beta]
    ab = frame_alpha_beta(frames, params['w_frame'], params['b_frame'],
                          params['w_sound'], params['b_sound'], params['b_syn'],
                          block_budget, vmem_limit)
    ab_flat = ab.reshape(-1)                                 # 1-D SMEM table (no 2->128 pad)

    # Megacore-robust grid: if B alone can't feed 2 TensorCores, split the row axis too.
    nt_total = r_pad // rt
    nsplit = 2 if (B % 2 == 1 and nt_total % 2 == 0) else 1
    # TODO(synk): B==1 with an odd row-tile count still runs on a single core.
    nt_inner = nt_total // nsplit
    grid = (B * nsplit, nt_inner)

    if nsplit == 1:
        bidx = lambda p: p
        tidx = lambda p, j: j
    else:
        bidx = lambda p: p // nsplit
        tidx = lambda p, j: (p % nsplit) * nt_inner + j

    kernel = functools.partial(netwrapper_kernel, B=B, nsplit=nsplit,
                               nt_inner=nt_inner, rt=rt, r_valid=R, r_pad=r_pad)

    pred_r, gt_r, weight_r, lacc = pl.pallas_call(
        kernel,
        grid=grid,
        in_specs=[
            pl.BlockSpec(memory_space=pltpu.MemorySpace.SMEM),                  # alpha/beta
            pl.BlockSpec((1, rt, LANE), lambda p, j: (bidx(p), tidx(p, j), 0)),  # mag_mix f32
            pl.BlockSpec((N, 1, rt, LANE), lambda p, j: (0, bidx(p), tidx(p, j), 0)),  # mags bf16
        ],
        out_specs=[
            pl.BlockSpec((N, 1, rt, LANE), lambda p, j: (0, bidx(p), tidx(p, j), 0)),  # pred bf16
            pl.BlockSpec((N, 1, rt, LANE), lambda p, j: (0, bidx(p), tidx(p, j), 0)),  # gt int8
            pl.BlockSpec((1, rt, LANE), lambda p, j: (bidx(p), tidx(p, j), 0)),        # weight f32
            pl.BlockSpec((1, rt, LANE), lambda p, j: (p, 0, 0)),                       # loss acc
        ],
        out_shape=(
            jax.ShapeDtypeStruct((N, B, r_pad, LANE), jnp.bfloat16),
            jax.ShapeDtypeStruct((N, B, r_pad, LANE), jnp.int8),
            jax.ShapeDtypeStruct((B, r_pad, LANE), jnp.float32),
            jax.ShapeDtypeStruct((B * nsplit, rt, LANE), jnp.float32),
        ),
        compiler_params=pltpu.CompilerParams(
            dimension_semantics=("parallel", "arbitrary"),
            vmem_limit_bytes=vmem_limit),
    )(ab_flat, mag_mix_r, mags_r)

    # nn.BCELoss(weight=weight, reduction='mean') over the stacked (N,B,1,F,T) masks.
    loss = jnp.sum(lacc) / (N * B * FT)

    outputs = {
        'pred_masks': pred_r[:, :, :R].reshape(N, B, F, T),   # bf16 (cast up if needed)
        'gt_masks': gt_r[:, :, :R].reshape(N, B, F, T),       # int8 {0,1} (exact)
        'mag_mix': mag_mix2 + 1e-10,                          # recomputed at the consumer
        'mags': mags2,
        'weight': weight_r[:, :R].reshape(B, F, T),
    }
    return loss, outputs


if __name__ == "__main__":
    # small shapes consistent with the forward pass
    B, N = 2, 2            # batch, mix_num
    F, T = 32, 16          # freq bins, time frames (F*T = 512, multiple of 128)
    C, Tf, H, W = 3, 3, 8, 8
    K = 8                  # feature dimension shared by sound / frame nets

    key = jax.random.PRNGKey(0)
    k1, k2, k3, k4, k5, k6, k7 = jax.random.split(key, 7)

    mag_mix = jnp.abs(jax.random.normal(k1, (B, 1, F, T), jnp.float32))
    mags = jnp.abs(jax.random.normal(k2, (N, B, 1, F, T), jnp.float32))
    frames = jax.random.normal(k3, (N, B, C, Tf, H, W), jnp.float32)

    params = {
        'w_sound': 0.5 * jax.random.normal(k4, (1, K), jnp.float32),
        'b_sound': 0.1 * jax.random.normal(k5, (1, K), jnp.float32),
        'w_frame': 0.5 * jax.random.normal(k6, (C, K), jnp.float32),
        'b_frame': 0.1 * jax.random.normal(k7, (1, K), jnp.float32),
        'b_syn': jnp.zeros((1, 1), jnp.float32),
    }

    loss, outs = net_wrapper_forward(mag_mix, mags, frames, params)
    jax.block_until_ready((loss, outs))

    # ---- pure-JAX reference (same math) for validation ----
    mm_j = mag_mix[:, 0] + 1e-10
    w_j = jnp.clip(jnp.log1p(mm_j), 0.001, 10.0)
    logmag_j = jnp.log(mm_j)
    pooled_j = jnp.mean(frames.reshape(N, B, C, -1), axis=-1)
    ff_j = jax.nn.sigmoid(jnp.einsum('nbc,ck->nbk', pooled_j, params['w_frame'])
                          + params['b_frame'][0])
    alpha_j = ff_j @ params['w_sound'][0]
    beta_j = ff_j @ params['b_sound'][0] + params['b_syn'][0, 0]
    x_j = alpha_j[:, :, None, None] * logmag_j[None] + beta_j[:, :, None, None]
    pred_j = jax.nn.sigmoid(x_j)
    # the kernel reads mags in bf16 (threshold-only use); mirror that rounding here
    mags_bf = mags[:, :, 0].astype(jnp.bfloat16).astype(jnp.float32)
    gt_j = (mags_bf > 0.5 * mm_j[None]).astype(jnp.float32)
    bce_j = jnp.maximum(x_j, 0.0) - x_j * gt_j + jnp.log1p(jnp.exp(-jnp.abs(x_j)))
    loss_j = jnp.sum(w_j[None] * bce_j) / (N * B * F * T)

    assert bool(jnp.isfinite(loss)), "non-finite loss"
    assert outs['pred_masks'].shape == (N, B, F, T) and outs['pred_masks'].dtype == jnp.bfloat16
    assert outs['gt_masks'].shape == (N, B, F, T) and outs['gt_masks'].dtype == jnp.int8
    assert outs['weight'].shape == (B, F, T)
    assert jnp.allclose(outs['pred_masks'].astype(jnp.float32), pred_j, atol=5e-3)
    assert jnp.allclose(outs['gt_masks'].astype(jnp.float32), gt_j)
    assert jnp.allclose(outs['weight'], w_j, rtol=1e-6, atol=1e-6)
    assert jnp.allclose(loss, loss_j, rtol=1e-4, atol=1e-5)
    print("KERNEL_OK")
</pallas_src>

<mosaic_0001>
module attributes {stable_mosaic.version = 11 : i64} {
  func.func @frame_encoder_kernel(%arg0: i32, %arg1: i32, %arg2: memref<4x3x192xf32, #tpu.memory_space<vmem>>, %arg3: memref<3x8xf32, #tpu.memory_space<vmem>>, %arg4: memref<1x8xf32, #tpu.memory_space<vmem>>, %arg5: memref<1x8xf32, #tpu.memory_space<vmem>>, %arg6: memref<1x8xf32, #tpu.memory_space<vmem>>, %arg7: memref<1x1xf32, #tpu.memory_space<vmem>>, %arg8: memref<4x2xf32, #tpu.memory_space<vmem>>, %arg9: memref<4x3xf32, #tpu.memory_space<vmem>>) attributes {dimension_semantics = [#tpu.dimension_semantics<parallel>, #tpu.dimension_semantics<arbitrary>], iteration_bounds = array<i64: 1, 1>, scalar_prefetch = 0 : i64, scratch_operands = 1 : i64, tpu.core_type = #tpu.core_type<tc>, window_params = [{transform_indices = @transform_0, window_bounds = array<i64: 4, 3, 192>}, {pipeline_mode = #tpu.pipeline_mode<synchronous>, transform_indices = @transform_1, window_bounds = array<i64: 3, 8>}, {pipeline_mode = #tpu.pipeline_mode<synchronous>, transform_indices = @transform_2, window_bounds = array<i64: 1, 8>}, {pipeline_mode = #tpu.pipeline_mode<synchronous>, transform_indices = @transform_3, window_bounds = array<i64: 1, 8>}, {pipeline_mode = #tpu.pipeline_mode<synchronous>, transform_indices = @transform_4, window_bounds = array<i64: 1, 8>}, {pipeline_mode = #tpu.pipeline_mode<synchronous>, transform_indices = @transform_5, window_bounds = array<i64: 1, 1>}, {transform_indices = @transform_6, window_bounds = array<i64: 4, 2>}]} {
    %c0 = arith.constant 0 : index
    %c0_0 = arith.constant 0 : index
    %c0_1 = arith.constant 0 : index
    %0 = vector.load %arg2[%c0, %c0_0, %c0_1] : memref<4x3x192xf32, #tpu.memory_space<vmem>>, vector<4x3x192xf32>
    %cst = arith.constant dense<0.000000e+00> : vector<4x3xf32>
    %1 = vector.multi_reduction <add>, %0, %cst [2] : vector<4x3x192xf32> to vector<4x3xf32>
    %cst_2 = arith.constant 1.920000e+02 : f32
    %2 = vector.broadcast %cst_2 : f32 to vector<4x3xf32>
    %3 = arith.divf %1, %2 : vector<4x3xf32>
    %c0_3 = arith.constant 0 : index
    %c0_4 = arith.constant 0 : index
    %4 = vector.load %arg4[%c0_3, %c0_4] : memref<1x8xf32, #tpu.memory_space<vmem>>, vector<1x8xf32>
    %5 = vector.extract_strided_slice %3 {offsets = [0, 0], sizes = [4, 1], strides = [1, 1]} : vector<4x3xf32> to vector<4x1xf32>
    %c0_5 = arith.constant 0 : index
    %c0_6 = arith.constant 0 : index
    %6 = vector.load %arg3[%c0_5, %c0_6] : memref<3x8xf32, #tpu.memory_space<vmem>>, vector<1x8xf32>
    %7 = vector.broadcast %5 : vector<4x1xf32> to vector<4x8xf32>
    %8 = vector.broadcast %6 : vector<1x8xf32> to vector<4x8xf32>
    %9 = arith.mulf %7, %8 : vector<4x8xf32>
    %10 = vector.broadcast %4 : vector<1x8xf32> to vector<4x8xf32>
    %11 = arith.addf %10, %9 : vector<4x8xf32>
    %12 = vector.extract_strided_slice %3 {offsets = [0, 1], sizes = [4, 1], strides = [1, 1]} : vector<4x3xf32> to vector<4x1xf32>
    %c1 = arith.constant 1 : index
    %c0_7 = arith.constant 0 : index
    %13 = vector.load %arg3[%c1, %c0_7] : memref<3x8xf32, #tpu.memory_space<vmem>>, vector<1x8xf32>
    %14 = vector.broadcast %12 : vector<4x1xf32> to vector<4x8xf32>
    %15 = vector.broadcast %13 : vector<1x8xf32> to vector<4x8xf32>
    %16 = arith.mulf %14, %15 : vector<4x8xf32>
    %17 = arith.addf %11, %16 : vector<4x8xf32>
    %18 = vector.extract_strided_slice %3 {offsets = [0, 2], sizes = [4, 1], strides = [1, 1]} : vector<4x3xf32> to vector<4x1xf32>
    %c2 = arith.constant 2 : index
    %c0_8 = arith.constant 0 : index
    %19 = vector.load %arg3[%c2, %c0_8] : memref<3x8xf32, #tpu.memory_space<vmem>>, vector<1x8xf32>
    %20 = vector.broadcast %18 : vector<4x1xf32> to vector<4x8xf32>
    %21 = vector.broadcast %19 : vector<1x8xf32> to vector<4x8xf32>
    %22 = arith.mulf %20, %21 : vector<4x8xf32>
    %23 = arith.addf %17, %22 : vector<4x8xf32>
    %24 = arith.negf %23 : vector<4x8xf32>
    %25 = math.exp %24 : vector<4x8xf32>
    %cst_9 = arith.constant 1.000000e+00 : f32
    %26 = vector.broadcast %cst_9 : f32 to vector<4x8xf32>
    %27 = arith.addf %26, %25 : vector<4x8xf32>
    %28 = arith.divf %26, %27 : vector<4x8xf32>
    %c0_10 = arith.constant 0 : index
    %c0_11 = arith.constant 0 : index
    %29 = vector.load %arg5[%c0_10, %c0_11] : memref<1x8xf32, #tpu.memory_space<vmem>>, vector<1x8xf32>
    %30 = vector.broadcast %29 : vector<1x8xf32> to vector<4x8xf32>
    %31 = arith.mulf %28, %30 : vector<4x8xf32>
    %cst_12 = arith.constant dense<0.000000e+00> : vector<4xf32>
    %32 = vector.multi_reduction <add>, %31, %cst_12 [1] : vector<4x8xf32> to vector<4xf32>
    %33 = vector.shape_cast %32 : vector<4xf32> to vector<4x1xf32>
    %c0_13 = arith.constant 0 : index
    %c0_14 = arith.constant 0 : index
    %34 = vector.load %arg8[%c0_13, %c0_14] : memref<4x2xf32, #tpu.memory_space<vmem>>, vector<4x1xf32>
    tpu.vector_store %arg8[%c0_13, %c0_14], %33 {strides = array<i32>} : memref<4x2xf32, #tpu.memory_space<vmem>>, vector<4x1xf32>,
    %c0_15 = arith.constant 0 : index
    %c0_16 = arith.constant 0 : index
    %35 = vector.load %arg6[%c0_15, %c0_16] : memref<1x8xf32, #tpu.memory_space<vmem>>, vector<1x8xf32>
    %36 = vector.broadcast %35 : vector<1x8xf32> to vector<4x8xf32>
    %37 = arith.mulf %28, %36 : vector<4x8xf32>
    %cst_17 = arith.constant dense<0.000000e+00> : vector<4xf32>
    %38 = vector.multi_reduction <add>, %37, %cst_17 [1] : vector<4x8xf32> to vector<4xf32>
    %39 = vector.shape_cast %38 : vector<4xf32> to vector<4x1xf32>
    %c0_18 = arith.constant 0 : index
    %c0_19 = arith.constant 0 : index
    %40 = vector.load %arg7[%c0_18, %c0_19] : memref<1x1xf32, #tpu.memory_space<vmem>>, vector<1x1xf32>
    %41 = vector.extract %40[0, 0] : f32 from vector<1x1xf32>
    %42 = vector.broadcast %41 : f32 to vector<4x1xf32>
    %43 = arith.addf %39, %42 : vector<4x1xf32>
    %c0_20 = arith.constant 0 : index
    %c1_21 = arith.constant 1 : index
    %44 = vector.load %arg8[%c0_20, %c1_21] : memref<4x2xf32, #tpu.memory_space<vmem>>, vector<4x1xf32>
    tpu.vector_store %arg8[%c0_20, %c1_21], %43 {strides = array<i32>} : memref<4x2xf32, #tpu.memory_space<vmem>>, vector<4x1xf32>,
    return
  }
  func.func @transform_0(%arg0: i32, %arg1: i32) -> (i32, i32, i32) {
    %c0_i32 = arith.constant 0 : i32
    %c0_i32_0 = arith.constant 0 : i32
    return %arg0, %c0_i32, %arg1 : i32, i32, i32
  }
  func.func @transform_1(%arg0: i32, %arg1: i32) -> (i32, i32) {
    %c0_i32 = arith.constant 0 : i32
    %c0_i32_0 = arith.constant 0 : i32
    %c0_i32_1 = arith.constant 0 : i32
    return %c0_i32, %c0_i32_0 : i32, i32
  }
  func.func @transform_2(%arg0: i32, %arg1: i32) -> (i32, i32) {
    %c0_i32 = arith.constant 0 : i32
    %c0_i32_0 = arith.constant 0 : i32
    %c0_i32_1 = arith.constant 0 : i32
    return %c0_i32, %c0_i32_0 : i32, i32
  }
  func.func @transform_3(%arg0: i32, %arg1: i32) -> (i32, i32) {
    %c0_i32 = arith.constant 0 : i32
    %c0_i32_0 = arith.constant 0 : i32
    %c0_i32_1 = arith.constant 0 : i32
    return %c0_i32, %c0_i32_0 : i32, i32
  }
  func.func @transform_4(%arg0: i32, %arg1: i32) -> (i32, i32) {
    %c0_i32 = arith.constant 0 : i32
    %c0_i32_0 = arith.constant 0 : i32
    %c0_i32_1 = arith.constant 0 : i32
    return %c0_i32, %c0_i32_0 : i32, i32
  }
  func.func @transform_5(%arg0: i32, %arg1: i32) -> (i32, i32) {
    %c0_i32 = arith.constant 0 : i32
    %c0_i32_0 = arith.constant 0 : i32
    %c0_i32_1 = arith.constant 0 : i32
    return %c0_i32, %c0_i32_0 : i32, i32
  }
  func.func @transform_6(%arg0: i32, %arg1: i32) -> (i32, i32) {
    %c0_i32 = arith.constant 0 : i32
    %c0_i32_0 = arith.constant 0 : i32
    return %arg0, %c0_i32 : i32, i32
  }
}

</mosaic_0001>

<llo_original>
// kernel: tpu_custom_call.1
$region0: #{tpu_custom_call.1}
  #allocation0 [shape = 'u32[]', space=smem, size = 0x4, offset = 0x4, fixed_abs, tag = 'smem constant byte address 0x4 - core index']
  #allocation1 [shape = 'u32[72,128]{1,0:T(1,128)}', space=vmem, size = 0x9000, scoped, tag = 'internal scratch']
  #allocation2 [shape = 'f32[4,3]{1,0:T(4,128)}', space=vmem, size = 0x800, scoped, tag = 'scratch operand']
  #allocation3 [shape = 'f32[1,1]{1,0:T(1,128)S(1)}', space=vmem, size = 0x200, scoped, tag = 'scoped memory for tpu_custom_call.1']
  %s0 = inlined_call_operand.vmem [shape: f32[4,3,192], index: 0, kind: input, shape index: {}]
  %s1 = inlined_call_operand.vmem [shape: f32[3,8], index: 1, kind: input, shape index: {}]
  %s2 = inlined_call_operand.vmem [shape: f32[1,8], index: 2, kind: input, shape index: {}]
  %s3 = inlined_call_operand.vmem [shape: f32[1,8], index: 3, kind: input, shape index: {}]
  %s4 = inlined_call_operand.vmem [shape: f32[1,8], index: 4, kind: input, shape index: {}]
  %s5 = inlined_call_operand.<no memory space> [shape: f32[1,1], index: 5, kind: input, shape index: {}]
  %s6 = inlined_call_operand.vmem [shape: f32[4,2], index: 6, kind: output, shape index: {}]
  %s7 = sld [smem:[#allocation0]]
  $region34: #{tpu_custom_call.1} parent=0
    _
  %s9 = ssub.s32 1, %s7
  %s10 = scalar_select 0, %s9, %s7
  %v11 = vstv %s5
  %12 = vst [vmem:[#allocation3] sm:$0x1] %v11
  // Predicated region
  $region2: #{tpu_custom_call.1} parent=0 // pred_check
    _
  $region3: #{tpu_custom_call.1} parent=0 // pred_check_branch
    %14 = sbr.rel (0) target = $region5
  $region4: #{tpu_custom_call.1} parent=0 // pred_region
    _
  $region5: #{tpu_custom_call.1} parent=0 // pred_fallthru
    _
  // Predicated region
  $region6: #{tpu_custom_call.1} parent=0 // pred_check
    _
  $region7: #{tpu_custom_call.1} parent=0 // pred_check_branch
    %16 = sbr.rel (0) target = $region9
  $region8: #{tpu_custom_call.1} parent=0 // pred_region
    _
  $region9: #{tpu_custom_call.1} parent=0 // pred_fallthru
    _
  // Predicated region
  $region10: #{tpu_custom_call.1} parent=0 // pred_check
    _
  $region11: #{tpu_custom_call.1} parent=0 // pred_check_branch
    %18 = sbr.rel (0) target = $region13
  $region12: #{tpu_custom_call.1} parent=0 // pred_region
    _
  $region13: #{tpu_custom_call.1} parent=0 // pred_fallthru
    _
  // Predicated region
  $region14: #{tpu_custom_call.1} parent=0 // pred_check
    _
  $region15: #{tpu_custom_call.1} parent=0 // pred_check_branch
    %20 = sbr.rel (0) target = $region17
  $region16: #{tpu_custom_call.1} parent=0 // pred_region
    _
  $region17: #{tpu_custom_call.1} parent=0 // pred_fallthru
    _
  // Predicated region
  $region18: #{tpu_custom_call.1} parent=0 // pred_check
    _
  $region19: #{tpu_custom_call.1} parent=0 // pred_check_branch
    %22 = sbr.rel (0) target = $region21
  $region20: #{tpu_custom_call.1} parent=0 // pred_region
    _
  $region21: #{tpu_custom_call.1} parent=0 // pred_fallthru
    _
  // Predicated region
  $region22: #{tpu_custom_call.1} parent=0 // pred_check
    _
  $region23: #{tpu_custom_call.1} parent=0 // pred_check_branch
    %24 = sbr.rel (0) target = $region25
  $region24: #{tpu_custom_call.1} parent=0 // pred_region
    _
  $region25: #{tpu_custom_call.1} parent=0 // pred_fallthru
    _
  %v25 = vld [vmem:[%s0] sm:$0x77]
  %v26 = vld [vmem:[%s0 + $0x8] sm:$0x77]
  %v27 = vld [vmem:[%s0 + $0x10] sm:$0x77]
  %v28 = vld [vmem:[%s0 + $0x18] sm:$0x77]
  %33 = vst [vmem:[#allocation1] ss:$2 sm:$0xff] %v25
  %v34 = vld.sshfl [vmem:[#allocation1] sm:$0xff pattern:$0x75316420]
  %v35 = vld.sshfl [vmem:[#allocation1 + $0x8] sm:$0xff pattern:$0x75316420]
  %s36 = scalar_lea.vmem [#allocation1], 16
  %37 = vst [vmem:[%s36] ss:$2 sm:$0xff] %v26
  %v38 = vld.sshfl [vmem:[#allocation1 + $0x10] sm:$0xff pattern:$0x75316420]
  %v39 = vld.sshfl [vmem:[#allocation1 + $0x18] sm:$0xff pattern:$0x75316420]
  %s40 = scalar_lea.vmem [#allocation1], 32
  %41 = vst [vmem:[%s40] ss:$2 sm:$0xff] %v27
  %v42 = vld.sshfl [vmem:[#allocation1 + $0x20] sm:$0xff pattern:$0x75316420]
  %v43 = vld.sshfl [vmem:[#allocation1 + $0x28] sm:$0xff pattern:$0x75316420]
  %s44 = scalar_lea.vmem [#allocation1], 48
  %45 = vst [vmem:[%s44] ss:$2 sm:$0xff] %v28
  %v46 = vld.sshfl [vmem:[#allocation1 + $0x30] sm:$0xff pattern:$0x75316420]
  %v47 = vld.sshfl [vmem:[#allocation1 + $0x38] sm:$0xff pattern:$0x75316420]
  %vm56 = vcmask 1042432
  %v57 = vsel %vm56, %v34, 0.0
  %vm58 = vcmask 518144
  %v59 = vsel %vm58, %v35, 0.0
  %v60 = vadd.f32 %v57, %v59
  %61 = vadd.xlane.f32.xlu0 %v60
  %v62 = vpop.xlane.xlu0 %61
  %v63 = vsel %vm56, %v38, 0.0
  %v64 = vsel %vm58, %v39, 0.0
  %v65 = vadd.f32 %v63, %v64
  %66 = vadd.xlane.f32.xlu0 %v65
  %v67 = vpop.xlane.xlu0 %66
  %v68 = vsel %vm56, %v42, 0.0
  %v69 = vsel %vm58, %v43, 0.0
  %v70 = vadd.f32 %v68, %v69
  %71 = vadd.xlane.f32.xlu0 %v70
  %v72 = vpop.xlane.xlu0 %71
  %v73 = vsel %vm56, %v46, 0.0
  %v74 = vsel %vm58, %v47, 0.0
  %v75 = vadd.f32 %v73, %v74
  %76 = vadd.xlane.f32.xlu0 %v75
  %v77 = vpop.xlane.xlu0 %76
  %v78 = vrcp.pop 192.0
  %v79 = vmul.f32 192.0, %v78
  %v80 = vsub.f32 1.0, %v79
  %v81 = vmul.f32 %v78, %v80
  %v82 = vadd.f32 %v78, %v81
  %vm83 = vweird.f32 %v78
  %v84 = vsel %vm83, %v78, %v82
  %v85 = vmul.f32 %v62, %v84
  %v86 = vmul.f32 %v67, %v84
  %v87 = vmul.f32 %v72, %v84
  %v88 = vmul.f32 %v77, %v84
  %v89 = vld [vmem:[%s2] sm:$0x1]
  %v90 = vld [vmem:[%s1] sm:$0x1]
  %v91 = vperm.slane %v85, 0
  %v92 = vperm.slane %v86, 0
  %v93 = vperm.slane %v87, 0
  %v94 = vperm.slane %v88, 0
  %v95 = vperm.slane %v90, 0
  %v97 = vlaneseq
  %v98 = vshrl.u32 %v97, 7
  %100 = vset.pattern.permute.xlu0 %v98
  %101 = vperm.xlu0 %100, %v95
  %v102 = vpop.permute.xlu0 %101
  %v104 = vmul.f32 %v91, %v102
  %v105 = vmul.f32 %v92, %v102
  %v106 = vmul.f32 %v93, %v102
  %v107 = vmul.f32 %v94, %v102
  %v109 = vperm.slane %v89, 0
  %115 = vset.pattern.permute.xlu0 0
  %116 = vperm.xlu0 %115, %v104
  %v117 = vpop.permute.xlu0 %116
  %118 = vset.pattern.permute.xlu0 0
  %119 = vperm.xlu0 %118, %v105
  %v120 = vpop.permute.xlu0 %119
  %121 = vset.pattern.permute.xlu0 0
  %122 = vperm.xlu0 %121, %v106
  %v123 = vpop.permute.xlu0 %122
  %124 = vset.pattern.permute.xlu0 0
  %125 = vperm.xlu0 %124, %v107
  %v126 = vpop.permute.xlu0 %125
  %v127 = vlaneseq
  %v128 = vand.u32 %v127, 127
  %v129 = vperm.slane %v117, %v128
  %v130 = vperm.slane %v120, %v128
  %v131 = vperm.slane %v123, %v128
  %v132 = vperm.slane %v126, %v128
  %vm133 = vcmask 1041409
  %v134 = vsel %vm133, %v130, %v129
  %vm135 = vcmask 1042434
  %v136 = vsel %vm135, %v131, %v134
  %vm137 = vcmask 1043459
  %v138 = vsel %vm137, %v132, %v136
  %v140 = vadd.f32 %v109, %v138
  %v141 = vld [vmem:[%s1 + $0x1] sm:$0x1]
  %v142 = vperm.slane %v85, 1
  %v143 = vperm.slane %v86, 1
  %v144 = vperm.slane %v87, 1
  %v145 = vperm.slane %v88, 1
  %v146 = vperm.slane %v141, 0
  %v148 = vlaneseq
  %v149 = vshrl.u32 %v148, 7
  %151 = vset.pattern.permute.xlu0 %v149
  %152 = vperm.xlu0 %151, %v146
  %v153 = vpop.permute.xlu0 %152
  %v155 = vmul.f32 %v142, %v153
  %v156 = vmul.f32 %v143, %v153
  %v157 = vmul.f32 %v144, %v153
  %v158 = vmul.f32 %v145, %v153
  %163 = vset.pattern.permute.xlu0 0
  %164 = vperm.xlu0 %163, %v155
  %v165 = vpop.permute.xlu0 %164
  %166 = vset.pattern.permute.xlu0 0
  %167 = vperm.xlu0 %166, %v156
  %v168 = vpop.permute.xlu0 %167
  %169 = vset.pattern.permute.xlu0 0
  %170 = vperm.xlu0 %169, %v157
  %v171 = vpop.permute.xlu0 %170
  %172 = vset.pattern.permute.xlu0 0
  %173 = vperm.xlu0 %172, %v158
  %v174 = vpop.permute.xlu0 %173
  %v175 = vperm.slane %v165, %v128
  %v176 = vperm.slane %v168, %v128
  %v177 = vperm.slane %v171, %v128
  %v178 = vperm.slane %v174, %v128
  %v179 = vsel %vm133, %v176, %v175
  %v180 = vsel %vm135, %v177, %v179
  %v181 = vsel %vm137, %v178, %v180
  %v183 = vadd.f32 %v140, %v181
  %v184 = vld [vmem:[%s1 + $0x2] sm:$0x1]
  %v185 = vperm.slane %v85, 2
  %v186 = vperm.slane %v86, 2
  %v187 = vperm.slane %v87, 2
  %v188 = vperm.slane %v88, 2
  %v189 = vperm.slane %v184, 0
  %v191 = vlaneseq
  %v192 = vshrl.u32 %v191, 7
  %194 = vset.pattern.permute.xlu0 %v192
  %195 = vperm.xlu0 %194, %v189
  %v196 = vpop.permute.xlu0 %195
  %v198 = vmul.f32 %v185, %v196
  %v199 = vmul.f32 %v186, %v196
  %v200 = vmul.f32 %v187, %v196
  %v201 = vmul.f32 %v188, %v196
  %206 = vset.pattern.permute.xlu0 0
  %207 = vperm.xlu0 %206, %v198
  %v208 = vpop.permute.xlu0 %207
  %209 = vset.pattern.permute.xlu0 0
  %210 = vperm.xlu0 %209, %v199
  %v211 = vpop.permute.xlu0 %210
  %212 = vset.pattern.permute.xlu0 0
  %213 = vperm.xlu0 %212, %v200
  %v214 = vpop.permute.xlu0 %213
  %215 = vset.pattern.permute.xlu0 0
  %216 = vperm.xlu0 %215, %v201
  %v217 = vpop.permute.xlu0 %216
  %v218 = vperm.slane %v208, %v128
  %v219 = vperm.slane %v211, %v128
  %v220 = vperm.slane %v214, %v128
  %v221 = vperm.slane %v217, %v128
  %v222 = vsel %vm133, %v219, %v218
  %v223 = vsel %vm135, %v220, %v222
  %v224 = vsel %vm137, %v221, %v223
  %v226 = vadd.f32 %v183, %v224
  %v227 = vxor.u32 %v226, 2147483648
  %v228 = vmul.f32 %v227, 1.442695
  %v229 = vpow.pop %v228
  %v230 = vadd.f32 %v229, 1.0
  %v231 = vrcp.pop %v230
  %v232 = vmul.f32 %v230, %v231
  %v233 = vsub.f32 1.0, %v232
  %v234 = vmul.f32 %v231, %v233
  %v235 = vadd.f32 %v231, %v234
  %vm236 = vweird.f32 %v230
  %vm237 = vweird.f32 %v231
  %vm238 = vmor %vm236, %vm237
  %v239 = vsel %vm238, %v231, %v235
  %v240 = vand.u32 2147483647, %v230
  %vm241 = vcmp.eq.f32.partialorder %v240, 8.507059e+37
  %v242 = vand.u32 %v230, 2147483648
  %v243 = vor.u32 1.1754944e-38, %v242
  %v244 = vsel %vm241, %v243, %v239
  %v245 = vmul.f32 1.0, %v244
  %v246 = vld [vmem:[%s3] sm:$0x1]
  %v248 = vperm.slane %v246, 0
  %v250 = vmul.f32 %v245, %v248
  %vm251 = vcmask 60416
  %v252 = vsel %vm251, %v250, 0.0
  %253 = vadd.xlane.f32.xlu0 %v252
  %v254 = vpop.xlane.xlu0 %253
  %vm255 = vcmask 3072
  %256 = vst.msk [vmem:[%s6] sm:$0xf] %vm255, %v254
  %v257 = vld [vmem:[%s4] sm:$0x1]
  %v259 = vperm.slane %v257, 0
  %v261 = vmul.f32 %v245, %v259
  %v262 = vsel %vm251, %v261, 0.0
  %263 = vadd.xlane.f32.xlu0 %v262
  %v264 = vpop.xlane.xlu0 %263
  %v265 = vld [vmem:[#allocation3] sm:$0x1]
  %s266 = vtos %v265
  %v267 = vstv %s266
  %v268 = vadd.f32 %v264, %v267
  %vm269 = vcmask 11272
  %270 = vst.msk [vmem:[%s6] sm:$0xf] %vm269, %v268
  // Predicated region
  $region26: #{tpu_custom_call.1} parent=0 // pred_check
    _
  $region27: #{tpu_custom_call.1} parent=0 // pred_check_branch
    %272 = sbr.rel (0) target = $region29
  $region28: #{tpu_custom_call.1} parent=0 // pred_region
    _
  $region29: #{tpu_custom_call.1} parent=0 // pred_fallthru
    _
  // Predicated region
  $region30: #{tpu_custom_call.1} parent=0 // pred_check
    _
  $region31: #{tpu_custom_call.1} parent=0 // pred_check_branch
    %274 = sbr.rel (0) target = $region33
  $region32: #{tpu_custom_call.1} parent=0 // pred_region
    _
  $region33: #{tpu_custom_call.1} parent=0 // pred_fallthru
    _

</llo_original>
